<compile_context>
chip_gen: v7x
topology: tpu7x:2x2x1
jax: 0.10.0
libtpu: 0.0.40
codegen_flags: <defaults>
</compile_context>

<pallas_src>
import jax
import jax.numpy as jnp
from jax import lax
from jax.experimental import pallas as pl
from jax.experimental.pallas import tpu as pltpu


# ----------------------------------------------------------------------------
# Helpers
# ----------------------------------------------------------------------------
def _full_spec(shape):
    """Whole-array VMEM-resident block (constant index map -> DMA'd once)."""
    nd = len(shape)
    return pl.BlockSpec(shape, lambda *_: (0,) * nd)


def _pick_time_tile(T, target=16):
    t = min(T, target)
    while T % t:
        t -= 1
    return t


# ----------------------------------------------------------------------------
# Dense projection kernel (row-tiled)
# ----------------------------------------------------------------------------
def _linear_kernel(x_ref, w_ref, b_ref, o_ref):
    o_ref[...] = (jnp.dot(x_ref[...], w_ref[...],
                          preferred_element_type=jnp.float32) + b_ref[...])


def linear(x, w, b, row_tile=256):
    M, Din = x.shape
    Dout = w.shape[1]
    tm = min(row_tile, M)
    return pl.pallas_call(
        _linear_kernel,
        out_shape=jax.ShapeDtypeStruct((M, Dout), jnp.float32),
        grid=(pl.cdiv(M, tm),),
        in_specs=[pl.BlockSpec((tm, Din), lambda i: (i, 0)),
                  pl.BlockSpec((Din, Dout), lambda i: (0, 0)),
                  pl.BlockSpec((1, Dout), lambda i: (0, 0))],
        out_specs=pl.BlockSpec((tm, Dout), lambda i: (i, 0)),
        compiler_params=pltpu.CompilerParams(
            dimension_semantics=("parallel",)),
    )(x, w, b)


# ----------------------------------------------------------------------------
# Bidirectional LSTM recurrence kernel (input projection hoisted outside)
# ----------------------------------------------------------------------------
def _bilstm_rec_kernel(gx_ref, mask_ref, whh_ref, out_ref, h_scr, c_scr):
    # gx_ref : (Tt, N, 4H)  precomputed x @ Wih + b for this direction/time tile
    # mask   : (Tt, N, 1)   1.0 where t < len[n]
    # whh    : (H, 4H)      this direction's recurrent weights
    # out    : (Tt, N, H)
    d = pl.program_id(0)              # 0 = forward, 1 = backward
    tb = pl.program_id(1)             # time-tile index (reversed for backward)
    Tt = gx_ref.shape[0]
    H = whh_ref.shape[0]

    @pl.when(tb == 0)
    def _():
        h_scr[...] = jnp.zeros_like(h_scr)
        c_scr[...] = jnp.zeros_like(c_scr)

    def step(s, carry):
        # forward walks the tile 0..Tt-1, backward walks Tt-1..0
        lt = jnp.where(d == 0, s, Tt - 1 - s)
        h = h_scr[...]
        c = c_scr[...]
        gates = gx_ref[lt] + jnp.dot(h, whh_ref[...],
                                     preferred_element_type=jnp.float32)
        i = jax.nn.sigmoid(gates[:, 0 * H:1 * H])
        f = jax.nn.sigmoid(gates[:, 1 * H:2 * H])
        g = jnp.tanh(gates[:, 2 * H:3 * H])
        o = jax.nn.sigmoid(gates[:, 3 * H:4 * H])
        c_new = f * c + i * g
        h_new = o * jnp.tanh(c_new)
        valid = mask_ref[lt]                       # (N, 1)
        # packed-sequence semantics: freeze state on padding frames and zero
        # the padded outputs (pad_packed_sequence).
        h_scr[...] = valid * h_new + (1.0 - valid) * h
        c_scr[...] = valid * c_new + (1.0 - valid) * c
        out_ref[lt] = valid * h_new
        return carry

    lax.fori_loop(0, Tt, step, 0)


def bilstm(x, lens, p):
    """Bidirectional LSTM layer with packed-sequence semantics.

    p['wih']: (2, D, 4H), p['whh']: (2, H, 4H), p['b']: (2, 1, 4H)
    Returns (T, N, 2H) with padded timesteps zeroed.
    """
    T, N, D = x.shape
    H = p['whh'].shape[1]

    # Hoisted input projection: one wide MXU matmul covering both directions.
    wih_all = jnp.concatenate([p['wih'][0], p['wih'][1]], axis=1)   # (D, 8H)
    b_all = jnp.concatenate([p['b'][0], p['b'][1]], axis=1)         # (1, 8H)
    gx = linear(x.reshape(T * N, D), wih_all, b_all).reshape(T, N, 8 * H)
    gx = jnp.stack([gx[..., :4 * H], gx[..., 4 * H:]], axis=0)      # (2,T,N,4H)

    mask = (jnp.arange(T, dtype=jnp.int32)[:, None]
            < lens[None, :]).astype(jnp.float32)[:, :, None]        # (T, N, 1)

    Tt = _pick_time_tile(T)
    nTB = T // Tt

    def t_blk(d, tb):   # reversed time-tile order for the backward direction
        return jnp.where(d == 0, tb, nTB - 1 - tb)

    out = pl.pallas_call(
        _bilstm_rec_kernel,
        out_shape=jax.ShapeDtypeStruct((2, T, N, H), jnp.float32),
        grid=(2, nTB),
        in_specs=[
            pl.BlockSpec((None, Tt, N, 4 * H),
                         lambda d, tb: (d, t_blk(d, tb), 0, 0)),
            pl.BlockSpec((Tt, N, 1), lambda d, tb: (t_blk(d, tb), 0, 0)),
            pl.BlockSpec((None, H, 4 * H), lambda d, tb: (d, 0, 0)),
        ],
        out_specs=pl.BlockSpec((None, Tt, N, H),
                               lambda d, tb: (d, t_blk(d, tb), 0, 0)),
        scratch_shapes=[pltpu.VMEM((N, H), jnp.float32),
                        pltpu.VMEM((N, H), jnp.float32)],
        compiler_params=pltpu.CompilerParams(
            dimension_semantics=("parallel", "arbitrary")),
    )(gx, mask, p['whh'])

    # PyTorch bidirectional layout: [forward ; backward] along features.
    return jnp.concatenate([out[0], out[1]], axis=-1)


# ----------------------------------------------------------------------------
# Listener (pyramid) — plain-JAX glue around the kernels
# ----------------------------------------------------------------------------
def condense(x, lens):
    # pBLSTMLayer.condense_input with batch_first=False
    T, N, D = x.shape
    if T % 2 != 0:
        x = x[:-1]
        T -= 1
    x = jnp.transpose(x, (1, 0, 2)).reshape(N, T // 2, 2 * D)
    x = jnp.transpose(x, (1, 0, 2))                                  # (T/2,N,2D)
    return x, lens // 2


def listener_forward(params, speech_input, speech_lens):
    lens = speech_lens
    out = bilstm(speech_input, lens, params['lstm0'])
    # LockedDropout with p=0.0 is the identity -> omitted.
    for lp in params['pblstm']:
        x, lens = condense(out, lens)
        out = bilstm(x, lens, lp)
    T, N, D2 = out.shape
    flat = out.reshape(T * N, D2)
    # Fused key|value projection: one wider matmul, one kernel launch.
    kv_w = jnp.concatenate([params['key_w'], params['val_w']], axis=1)
    kv_b = jnp.concatenate([params['key_b'], params['val_b']], axis=1)
    kv = linear(flat, kv_w, kv_b).reshape(T, N, -1)
    K = params['key_w'].shape[1]
    keys, values = kv[..., :K], kv[..., K:]
    return keys, values, lens


# ----------------------------------------------------------------------------
# Fused Speller decoder: whole teacher-forced decode loop in one kernel
# ----------------------------------------------------------------------------
def _speller_kernel(emb_ref, keys_ref, vals_ref, mask_ref,
                    w1e_ref, w1c_ref, whh1_ref, b1_ref,
                    w2_ref, whh2_ref, b2_ref,
                    cpq_ref, cpc_ref, cpb_ref,
                    logits_ref, attn_ref,
                    h1_scr, c1_scr, h2_scr, c2_scr, ctx_scr):
    i = pl.program_id(0)
    H1 = whh1_ref.shape[0]
    H2 = whh2_ref.shape[0]

    @pl.when(i == 0)
    def _():
        h1_scr[...] = jnp.zeros_like(h1_scr)
        c1_scr[...] = jnp.zeros_like(c1_scr)
        h2_scr[...] = jnp.zeros_like(h2_scr)
        c2_scr[...] = jnp.zeros_like(c2_scr)
        ctx_scr[...] = jnp.zeros_like(ctx_scr)

    emb = emb_ref[...]                      # (N, E)  teacher-forced token embed
    ctx = ctx_scr[...]                      # (N, V)  previous step's context

    # LSTMCell 1 on [emb ; ctx] — weights pre-split, no in-kernel concat.
    g1 = (jnp.dot(emb, w1e_ref[...], preferred_element_type=jnp.float32)
          + jnp.dot(ctx, w1c_ref[...], preferred_element_type=jnp.float32)
          + jnp.dot(h1_scr[...], whh1_ref[...],
                    preferred_element_type=jnp.float32)
          + b1_ref[...])
    i1 = jax.nn.sigmoid(g1[:, 0 * H1:1 * H1])
    f1 = jax.nn.sigmoid(g1[:, 1 * H1:2 * H1])
    gg1 = jnp.tanh(g1[:, 2 * H1:3 * H1])
    o1 = jax.nn.sigmoid(g1[:, 3 * H1:4 * H1])
    c1 = f1 * c1_scr[...] + i1 * gg1
    h1 = o1 * jnp.tanh(c1)
    h1_scr[...] = h1
    c1_scr[...] = c1

    # LSTMCell 2
    g2 = (jnp.dot(h1, w2_ref[...], preferred_element_type=jnp.float32)
          + jnp.dot(h2_scr[...], whh2_ref[...],
                    preferred_element_type=jnp.float32)
          + b2_ref[...])
    i2 = jax.nn.sigmoid(g2[:, 0 * H2:1 * H2])
    f2 = jax.nn.sigmoid(g2[:, 1 * H2:2 * H2])
    gg2 = jnp.tanh(g2[:, 2 * H2:3 * H2])
    o2 = jax.nn.sigmoid(g2[:, 3 * H2:4 * H2])
    c2 = f2 * c2_scr[...] + i2 * gg2
    h2 = o2 * jnp.tanh(c2)                  # query (N, K)
    h2_scr[...] = h2
    c2_scr[...] = c2

    # Attention over VMEM-resident keys/values (S, N, *); no in-kernel
    # transpose (attention map is written (S, N) and transposed once outside).
    # TODO(synk): Attention 'mode' is not defined in the source; plain
    # (unscaled) dot-product attention with length masking is implemented.
    scores = jnp.sum(keys_ref[...] * h2[None, :, :], axis=-1)        # (S, N)
    scores = jnp.where(mask_ref[...] > 0.0, scores,
                       jnp.full_like(scores, -1e30))
    m = jnp.max(scores, axis=0, keepdims=True)                       # (1, N)
    p = jnp.exp(scores - m)
    attn = p * pl.reciprocal(jnp.sum(p, axis=0, keepdims=True),
                             approx=True)                            # (S, N)
    new_ctx = jnp.sum(attn[:, :, None] * vals_ref[...], axis=0)      # (N, V)
    ctx_scr[...] = new_ctx
    attn_ref[...] = attn

    # charProb on [h2 ; ctx]
    logits_ref[...] = (jnp.dot(h2, cpq_ref[...],
                               preferred_element_type=jnp.float32)
                       + jnp.dot(new_ctx, cpc_ref[...],
                                 preferred_element_type=jnp.float32)
                       + cpb_ref[...])


def greedy_decode(sparams, keys, values, y, src_key_lens):
    """Teacher-forced decode (sample_prob = 0.0) fully fused into one kernel."""
    L, N = y.shape
    S, _, K = keys.shape
    V = values.shape[-1]
    E = sparams['embedding'].shape[1]
    H1 = sparams['l1_whh'].shape[0]
    VOC = sparams['cp_w'].shape[1]

    mask = (jnp.arange(S, dtype=jnp.int32)[:, None]
            < src_key_lens[None, :]).astype(jnp.float32)             # (S, N)
    embeds = sparams['embedding'][y]                                 # (L, N, E)
    w1e, w1c = sparams['l1_wih'][:E], sparams['l1_wih'][E:]
    cpq, cpc = sparams['cp_w'][:K], sparams['cp_w'][K:]

    logits, attns_sn = pl.pallas_call(
        _speller_kernel,
        out_shape=(jax.ShapeDtypeStruct((L, N, VOC), jnp.float32),
                   jax.ShapeDtypeStruct((L, S, N), jnp.float32)),
        grid=(L,),
        in_specs=[
            pl.BlockSpec((None, N, E), lambda i: (i, 0, 0)),   # token embeds
            _full_spec((S, N, K)),                             # keys (resident)
            _full_spec((S, N, V)),                             # values (resident)
            _full_spec((S, N)),                                # length mask
            _full_spec((E, 4 * H1)), _full_spec((V, 4 * H1)),
            _full_spec((H1, 4 * H1)), _full_spec((1, 4 * H1)),
            _full_spec((H1, 4 * K)), _full_spec((K, 4 * K)),
            _full_spec((1, 4 * K)),
            _full_spec((K, VOC)), _full_spec((V, VOC)), _full_spec((1, VOC)),
        ],
        out_specs=(pl.BlockSpec((None, N, VOC), lambda i: (i, 0, 0)),
                   pl.BlockSpec((None, S, N), lambda i: (i, 0, 0))),
        scratch_shapes=[pltpu.VMEM((N, H1), jnp.float32),
                        pltpu.VMEM((N, H1), jnp.float32),
                        pltpu.VMEM((N, K), jnp.float32),
                        pltpu.VMEM((N, K), jnp.float32),
                        pltpu.VMEM((N, V), jnp.float32)],
        compiler_params=pltpu.CompilerParams(
            dimension_semantics=("arbitrary",)),
    )(embeds, keys, values, mask,
      w1e, w1c, sparams['l1_whh'], sparams['l1_b'],
      sparams['l2_wih'], sparams['l2_whh'], sparams['l2_b'],
      cpq, cpc, sparams['cp_b'])

    return logits, attns_sn.transpose(0, 2, 1)                       # (L, N, S)


def las_forward(lparams, sparams, speech_input, speech_lens, transcript_inputs,
                sample_prob=0.0):
    # TODO(synk): only deterministic teacher forcing (sample_prob == 0.0) is
    # implemented; scheduled sampling / beam decode need data-dependent tokens.
    assert sample_prob == 0.0
    keys, values, src_key_lens = listener_forward(
        lparams, speech_input, speech_lens)
    logits, attns = greedy_decode(sparams, keys, values, transcript_inputs,
                                  src_key_lens)
    return logits, src_key_lens, attns


# ----------------------------------------------------------------------------
# Deterministic parameter init
# ----------------------------------------------------------------------------
def _u(key, shape, scale=0.1):
    return jax.random.uniform(key, shape, minval=-scale, maxval=scale,
                              dtype=jnp.float32)


def init_bilstm(key, D, H):
    k = jax.random.split(key, 6)
    return dict(
        wih=jnp.stack([_u(k[0], (D, 4 * H)), _u(k[3], (D, 4 * H))]),
        whh=jnp.stack([_u(k[1], (H, 4 * H)), _u(k[4], (H, 4 * H))]),
        b=jnp.stack([_u(k[2], (1, 4 * H)), _u(k[5], (1, 4 * H))]),
    )


def init_params(key, F, LH, num_layers, key_size, value_size,
                speller_hidden, embed_dims, vocab_size, pad_idx):
    ks = jax.random.split(key, 16)
    lparams = dict(
        lstm0=init_bilstm(ks[0], F, LH),
        pblstm=[init_bilstm(ks[1 + i], 4 * LH, LH) for i in range(num_layers)],
        key_w=_u(ks[5], (2 * LH, key_size)), key_b=_u(ks[6], (1, key_size)),
        val_w=_u(ks[7], (2 * LH, value_size)), val_b=_u(ks[8], (1, value_size)),
    )
    emb = _u(ks[9], (vocab_size, embed_dims))
    emb = emb.at[pad_idx].set(0.0)                                   # padding_idx
    sparams = dict(
        embedding=emb,
        l1_wih=_u(ks[10], (embed_dims + value_size, 4 * speller_hidden)),
        l1_whh=_u(ks[11], (speller_hidden, 4 * speller_hidden)),
        l1_b=_u(ks[12], (1, 4 * speller_hidden)),
        l2_wih=_u(ks[13], (speller_hidden, 4 * key_size)),
        l2_whh=_u(ks[14], (key_size, 4 * key_size)),
        l2_b=_u(ks[15], (1, 4 * key_size)),
        cp_w=_u(jax.random.fold_in(key, 100), (key_size + value_size, vocab_size)),
        cp_b=_u(jax.random.fold_in(key, 101), (1, vocab_size)),
    )
    return lparams, sparams


# ----------------------------------------------------------------------------
if __name__ == "__main__":
    # small config: listener F=8, hidden=16, num_layers(pyramid)=2,
    # key=value=16; speller hidden=32, embed=8, vocab=12 (pad=0, sos=1, eos=2)
    F, LH, NUM_LAYERS = 8, 16, 2
    KEY_SIZE, VALUE_SIZE = 16, 16
    SPELLER_H, EMBED, VOCAB, PAD, SOS = 32, 8, 12, 0, 1
    T, N, MAX_LEN = 16, 2, 5

    root = jax.random.PRNGKey(0)
    kp, kx, ky = jax.random.split(root, 3)
    lparams, sparams = init_params(kp, F, LH, NUM_LAYERS, KEY_SIZE, VALUE_SIZE,
                                   SPELLER_H, EMBED, VOCAB, PAD)

    speech_input = jax.random.normal(kx, (T, N, F), dtype=jnp.float32)  # (T,N,F)
    speech_lens = jnp.array([16, 12], dtype=jnp.int32)
    transcript_inputs = jax.random.randint(ky, (MAX_LEN, N), 3, VOCAB,
                                           dtype=jnp.int32)
    transcript_inputs = transcript_inputs.at[0, :].set(SOS)             # (L, N)

    logits, src_key_lens, attns = las_forward(
        lparams, sparams, speech_input, speech_lens, transcript_inputs,
        sample_prob=0.0)
    jax.block_until_ready((logits, src_key_lens, attns))

    assert logits.shape == (MAX_LEN, N, VOCAB)
    assert src_key_lens.shape == (N,)
    assert attns.shape == (MAX_LEN, N, T // (2 ** NUM_LAYERS))
    print("KERNEL_OK")
</pallas_src>

<mosaic_0001>
module attributes {stable_mosaic.version = 11 : i64} {
  func.func @_linear_kernel(%arg0: i32, %arg1: memref<32x8xf32, #tpu.memory_space<vmem>>, %arg2: memref<8x128xf32, #tpu.memory_space<vmem>>, %arg3: memref<1x128xf32, #tpu.memory_space<vmem>>, %arg4: memref<32x128xf32, #tpu.memory_space<vmem>>) attributes {dimension_semantics = [#tpu.dimension_semantics<parallel>], iteration_bounds = array<i64: 1>, scalar_prefetch = 0 : i64, scratch_operands = 0 : i64, tpu.core_type = #tpu.core_type<tc>, window_params = [{transform_indices = @transform_0, window_bounds = array<i64: 32, 8>}, {pipeline_mode = #tpu.pipeline_mode<synchronous>, transform_indices = @transform_1, window_bounds = array<i64: 8, 128>}, {pipeline_mode = #tpu.pipeline_mode<synchronous>, transform_indices = @transform_2, window_bounds = array<i64: 1, 128>}, {transform_indices = @transform_3, window_bounds = array<i64: 32, 128>}]} {
    %c0 = arith.constant 0 : index
    %c0_0 = arith.constant 0 : index
    %0 = vector.load %arg1[%c0, %c0_0] : memref<32x8xf32, #tpu.memory_space<vmem>>, vector<32x8xf32>
    %c0_1 = arith.constant 0 : index
    %c0_2 = arith.constant 0 : index
    %1 = vector.load %arg2[%c0_1, %c0_2] : memref<8x128xf32, #tpu.memory_space<vmem>>, vector<8x128xf32>
    %cst = arith.constant dense<0.000000e+00> : vector<32x128xf32>
    %2 = tpu.matmul %0, %1, %cst {dimension_numbers = #tpu.dot_dimension_numbers<[1], [0], [0], [1], [0, 0, 1, 1], [], []>} : vector<32x8xf32>, vector<8x128xf32>, vector<32x128xf32> -> vector<32x128xf32>
    %c0_3 = arith.constant 0 : index
    %c0_4 = arith.constant 0 : index
    %3 = vector.load %arg3[%c0_3, %c0_4] : memref<1x128xf32, #tpu.memory_space<vmem>>, vector<1x128xf32>
    %4 = vector.broadcast %3 : vector<1x128xf32> to vector<32x128xf32>
    %5 = arith.addf %2, %4 : vector<32x128xf32>
    %c0_5 = arith.constant 0 : index
    %c0_6 = arith.constant 0 : index
    %6 = vector.load %arg4[%c0_5, %c0_6] : memref<32x128xf32, #tpu.memory_space<vmem>>, vector<32x128xf32>
    tpu.vector_store %arg4[%c0_5, %c0_6], %5 {strides = array<i32>} : memref<32x128xf32, #tpu.memory_space<vmem>>, vector<32x128xf32>,
    return
  }
  func.func @transform_0(%arg0: i32) -> (i32, i32) {
    %c0_i32 = arith.constant 0 : i32
    %c0_i32_0 = arith.constant 0 : i32
    return %arg0, %c0_i32 : i32, i32
  }
  func.func @transform_1(%arg0: i32) -> (i32, i32) {
    %c0_i32 = arith.constant 0 : i32
    %c0_i32_0 = arith.constant 0 : i32
    %c0_i32_1 = arith.constant 0 : i32
    return %c0_i32, %c0_i32_0 : i32, i32
  }
  func.func @transform_2(%arg0: i32) -> (i32, i32) {
    %c0_i32 = arith.constant 0 : i32
    %c0_i32_0 = arith.constant 0 : i32
    %c0_i32_1 = arith.constant 0 : i32
    return %c0_i32, %c0_i32_0 : i32, i32
  }
  func.func @transform_3(%arg0: i32) -> (i32, i32) {
    %c0_i32 = arith.constant 0 : i32
    %c0_i32_0 = arith.constant 0 : i32
    return %arg0, %c0_i32 : i32, i32
  }
}

</mosaic_0001>

<llo_original>
// kernel: tpu_custom_call.1
$region0: #{tpu_custom_call.1}
  #allocation0 [shape = 'u32[]', space=smem, size = 0x4, offset = 0x4, fixed_abs, tag = 'smem constant byte address 0x4 - core index']
  #allocation1 [shape = 'u32[144,128]{1,0:T(1,128)}', space=vmem, size = 0x12000, scoped, tag = 'internal scratch']
  %s0 = inlined_call_operand.vmem [shape: f32[32,8], index: 0, kind: input, shape index: {}]
  %s1 = inlined_call_operand.vmem [shape: f32[8,128], index: 1, kind: input, shape index: {}]
  %s2 = inlined_call_operand.vmem [shape: f32[1,128], index: 2, kind: input, shape index: {}]
  %s3 = inlined_call_operand.hbm [shape: f32[32,128], index: 3, kind: output, shape index: {}]
  %s4 = sld [smem:[#allocation0]]
  $region22: #{tpu_custom_call.1} parent=0
    _
  %s6 = ssub.s32 1, %s4
  %s7 = scalar_select 0, %s6, %s4
  $region1: #{tpu_custom_call.1} parent=0
    #allocation2 [shape = 'u8[16384]{0}', space=vmem, size = 0x4000, scoped, tag = 'output window, operand 0, single buffered']
    #allocation3 [shape = 's32[1]{0}', space=sflag, size = 0x4, scoped, tag = 'scoped memory for tpu_custom_call.1']
    %8 = vsyncpa [#allocation3], 0
    // Predicated region
    $region2: #{tpu_custom_call.1} parent=1 // pred_check
      _
    $region3: #{tpu_custom_call.1} parent=1 // pred_check_branch
      %10 = sbr.rel (0) target = $region5
    $region4: #{tpu_custom_call.1} parent=1 // pred_region
      _
    $region5: #{tpu_custom_call.1} parent=1 // pred_fallthru
      _
    // Predicated region
    $region6: #{tpu_custom_call.1} parent=1 // pred_check
      _
    $region7: #{tpu_custom_call.1} parent=1 // pred_check_branch
      %12 = sbr.rel (0) target = $region9
    $region8: #{tpu_custom_call.1} parent=1 // pred_region
      _
    $region9: #{tpu_custom_call.1} parent=1 // pred_fallthru
      _
    // Predicated region
    $region10: #{tpu_custom_call.1} parent=1 // pred_check
      _
    $region11: #{tpu_custom_call.1} parent=1 // pred_check_branch
      %14 = sbr.rel (0) target = $region13
    $region12: #{tpu_custom_call.1} parent=1 // pred_region
      _
    $region13: #{tpu_custom_call.1} parent=1 // pred_fallthru
      _
    %v15 = vld [vmem:[%s0] sm:$0xff]
    %v16 = vld [vmem:[%s0 + $0x8] sm:$0xff]
    %v17 = vld [vmem:[%s0 + $0x10] sm:$0xff]
    %v18 = vld [vmem:[%s0 + $0x18] sm:$0xff]
    %v19 = vld [vmem:[%s1] sm:$0xff]
    %v20 = vld [vmem:[%s2] sm:$0x1]
    %v22 = vlaneseq
    %v23 = vshrl.u32 %v22, 7
    %v24 = vsub.s32 0, %v23
    %v25 = vrot.slane %v20, %v24
    %vm27 = vcmask 64512
    %v29 = vsel %vm27, %v15, 0
    %v32 = vsel %vm27, %v16, 0
    %v35 = vsel %vm27, %v17, 0
    %v38 = vsel %vm27, %v18, 0
    %40 = vmatprep.subr.mxu0 0.0
    %41 = vmatpush1.msra.mxu0 %v19
    %42 = vmatprep.subr.mxu0 0.0
    %43 = vmatpush1.msra.mxu0 0.0
    %44 = vmatprep.subr.mxu0 0.0
    %45 = vmatpush1.msra.mxu0 0.0
    %46 = vmatprep.subr.mxu0 0.0
    %47 = vmatpush1.msra.mxu0 0.0
    %48 = vmatprep.subr.mxu0 0.0
    %49 = vmatpush1.msra.mxu0 0.0
    %50 = vmatprep.subr.mxu0 0.0
    %51 = vmatpush1.msra.mxu0 0.0
    %52 = vmatprep.subr.mxu0 0.0
    %53 = vmatpush1.msra.mxu0 0.0
    %54 = vmatprep.subr.mxu0 0.0
    %55 = vmatpush1.msra.mxu0 0.0
    %56 = vmatprep.subr.mxu0 0.0
    %57 = vmatpush1.msra.mxu0 0.0
    %58 = vmatprep.subr.mxu0 0.0
    %59 = vmatpush1.msra.mxu0 0.0
    %60 = vmatprep.subr.mxu0 0.0
    %61 = vmatpush1.msra.mxu0 0.0
    %62 = vmatprep.subr.mxu0 0.0
    %63 = vmatpush1.msra.mxu0 0.0
    %64 = vmatprep.subr.mxu0 0.0
    %65 = vmatpush1.msra.mxu0 0.0
    %66 = vmatprep.subr.mxu0 0.0
    %67 = vmatpush1.msra.mxu0 0.0
    %68 = vmatprep.subr.mxu0 0.0
    %69 = vmatpush1.msra.mxu0 0.0
    %70 = vmatprep.subr.mxu0 0.0
    %71 = vmatpush1.msra.mxu0 0.0
    %72 = vmatprep.subr.mxu0 0.0
    %73 = vmatpush1.msra.mxu0 0.0
    %74 = vmatprep.subr.mxu0 0.0
    %75 = vmatpush1.msra.mxu0 0.0
    %76 = vmatprep.subr.mxu0 0.0
    %77 = vmatpush1.msra.mxu0 0.0
    %78 = vmatprep.subr.mxu0 0.0
    %79 = vmatpush1.msra.mxu0 0.0
    %80 = vmatprep.subr.mxu0 0.0
    %81 = vmatpush1.msra.mxu0 0.0
    %82 = vmatprep.subr.mxu0 0.0
    %83 = vmatpush1.msra.mxu0 0.0
    %84 = vmatprep.subr.mxu0 0.0
    %85 = vmatpush1.msra.mxu0 0.0
    %86 = vmatprep.subr.mxu0 0.0
    %87 = vmatpush1.msra.mxu0 0.0
    %88 = vmatprep.subr.mxu0 0.0
    %89 = vmatpush1.msra.mxu0 0.0
    %90 = vmatprep.subr.mxu0 0.0
    %91 = vmatpush1.msra.mxu0 0.0
    %92 = vmatprep.subr.mxu0 0.0
    %93 = vmatpush1.msra.mxu0 0.0
    %94 = vmatprep.subr.mxu0 0.0
    %95 = vmatpush1.msra.mxu0 0.0
    %96 = vmatprep.subr.mxu0 0.0
    %97 = vmatpush1.msra.mxu0 0.0
    %98 = vmatprep.subr.mxu0 0.0
    %99 = vmatpush1.msra.mxu0 0.0
    %100 = vmatprep.subr.mxu0 0.0
    %101 = vmatpush1.msra.mxu0 0.0
    %102 = vmatprep.subr.mxu0 0.0
    %103 = vmatpush1.msra.mxu0 0.0
    %104 = vmatprep.mubr.f32.mxu0 0.0
    %105 = vmatmul.mubr.f32.gmra.mrb[0].mxu0 %v29
    %v106 = vpop.f32.mrb[0].mxu0
    %v107 = vadd.f32 %v25, %v106
    %v108 = vpop.f32.mrb[0].mxu0
    %109 = vmatprep.mubr.f32.mxu0 0.0
    %110 = vmatmul.mubr.f32.gmra.mrb[0].mxu0 %v32
    %v111 = vpop.f32.mrb[0].mxu0
    %v112 = vadd.f32 %v25, %v111
    %v113 = vpop.f32.mrb[0].mxu0
    %114 = vmatprep.mubr.f32.mxu0 0.0
    %115 = vmatmul.mubr.f32.gmra.mrb[0].mxu0 %v35
    %v116 = vpop.f32.mrb[0].mxu0
    %v117 = vadd.f32 %v25, %v116
    %v118 = vpop.f32.mrb[0].mxu0
    %119 = vmatprep.mubr.f32.mxu0 0.0
    %120 = vmatmul.mubr.f32.gmra.mrb[0].mxu0 %v38
    %v121 = vpop.f32.mrb[0].mxu0
    %v122 = vadd.f32 %v25, %v121
    %v123 = vpop.f32.mrb[0].mxu0
    %124 = vdwg.mxu0
    %125 = vst [vmem:[#allocation2] sm:$0xff] %v107
    %126 = vst [vmem:[#allocation2 + $0x8] sm:$0xff] %v112
    %127 = vst [vmem:[#allocation2 + $0x10] sm:$0xff] %v117
    %128 = vst [vmem:[#allocation2 + $0x18] sm:$0xff] %v122
    // Predicated region
    $region14: #{tpu_custom_call.1} parent=1 // pred_check
      _
    $region15: #{tpu_custom_call.1} parent=1 // pred_check_branch
      %130 = sbr.rel (0) target = $region17
    $region16: #{tpu_custom_call.1} parent=1 // pred_region
      %s132 = ssub.s32 512, 512
      %133 = vsyncadd [#allocation3], %s132
      %s134 = sshll.u32 [#allocation2], 4
      %s135 = int_to_ptr.vmem [resolvable:$true] %s134
      %140 = dma.vmem_to_hbm [thread:$0]  %s135, 512, %s3, [#allocation3], 128, 128, 8
    $region17: #{tpu_custom_call.1} parent=1 // pred_fallthru
      _
    // Predicated region
    $region18: #{tpu_custom_call.1} parent=1 // pred_check
      _
    $region19: #{tpu_custom_call.1} parent=1 // pred_check_branch
      %142 = sbr.rel (0) target = $region21
    $region20: #{tpu_custom_call.1} parent=1 // pred_region
      %143 = dma.done [#allocation3], 512
    $region21: #{tpu_custom_call.1} parent=1 // pred_fallthru
      _
    %144 = vsyncpa [#allocation3], 1

</llo_original>
